<compile_context>
chip_gen: v6e
topology: v6e:2x2x1
jax: 0.10.0
libtpu: 0.0.40
codegen_flags: <defaults>
</compile_context>

<pallas_src>
import jax
import jax.numpy as jnp
from jax.experimental import pallas as pl
from jax.experimental.pallas import tpu as pltpu

_LANE = 128      # vreg lane width (last dim)
_SUBLANE = 8     # vreg sublane width (second-to-last dim)


def _round_up(x: int, m: int) -> int:
    return (x + m - 1) // m * m


def _make_mlp_kernel(n_hidden_layers: int):
    """Fused MLP kernel: n_hidden_layers x (Linear+ReLU) followed by the head."""

    def kernel(*refs):
        x_ref = refs[0]
        o_ref = refs[-1]
        p = refs[1:-1]  # alternating (W, b) pairs; last pair is the 1-wide head
        h = x_ref[...]
        for i in range(n_hidden_layers):
            w = p[2 * i][...]
            b = p[2 * i + 1][...]
            h = jnp.dot(h, w, preferred_element_type=jnp.float32) + b
            h = jnp.maximum(h, 0.0)  # ReLU
            # dropout: identity in eval mode (self.training == False)
        wh = p[2 * n_hidden_layers][...]
        bh = p[2 * n_hidden_layers + 1][...]
        o_ref[...] = jnp.dot(h, wh, preferred_element_type=jnp.float32) + bh

    return kernel


def tabptm_forward(x, params, *, is_regression: bool, d_out: int,
                   tile_m_max: int = 2048):
    """x: (batch, num_class, distance_num, numK) float32.
    params: list of (W, b) with W shape (in, out), b shape (1, out) (so the
    kernel computes h @ W + b, equivalent to torch's x @ W.T + b)."""
    num_batch, num_class = x.shape[:2]
    x2d = x.reshape(num_batch * num_class, -1).astype(jnp.float32)  # no pad copy
    n_rows, d_first = x2d.shape
    n_hidden = len(params) - 1

    # ---- row tiling: tile_m multiple of 8; ragged last tile (no row padding).
    rows_rounded = _round_up(n_rows, _SUBLANE)
    tile_m = min(_round_up(tile_m_max, _SUBLANE), rows_rounded)
    # v7x megacore: ensure >=2 grid steps whenever there is enough work so the
    # "parallel" row axis can be sharded across both TensorCores.
    if rows_rounded > _SUBLANE and pl.cdiv(rows_rounded, tile_m) < 2:
        tile_m = max(_SUBLANE, _round_up(pl.cdiv(rows_rounded, 2), _SUBLANE))
    grid_m = pl.cdiv(n_rows, tile_m)

    # ---- weights: lane-pad hidden widths to 128 (zeros are inert through
    # Linear+ReLU); the head stays at its logical width (1). x is NOT padded.
    flat_params = []
    prev = d_first
    n_layers = len(params)
    for li, (w, b) in enumerate(params):
        w = w.astype(jnp.float32)
        b = b.astype(jnp.float32).reshape(1, -1)
        din, dout_l = w.shape
        is_head = (li == n_layers - 1)
        dout_p = dout_l if is_head else _round_up(dout_l, _LANE)
        w_p = jnp.zeros((prev, dout_p), jnp.float32).at[:din, :dout_l].set(w)
        b_p = jnp.zeros((1, dout_p), jnp.float32).at[:, :dout_l].set(b)
        flat_params.append(w_p)
        flat_params.append(b_p)
        prev = dout_p
    head_w = flat_params[-2].shape[1]  # logical head width (== 1)

    # x tile marches down the rows; weights/biases use constant block indices
    # so they stay VMEM-resident across the whole grid (no re-DMA per step).
    in_specs = [pl.BlockSpec((tile_m, d_first), lambda i: (i, 0))]
    for arr in flat_params:
        in_specs.append(pl.BlockSpec(arr.shape, lambda i: (0, 0)))
    out_spec = pl.BlockSpec((tile_m, head_w), lambda i: (i, 0))

    # Advisory cost estimate (bandwidth-bound on x) -- de-padded traffic.
    flops = 0
    prev_dim = d_first
    for w_arr in flat_params[0::2]:
        flops += 2 * n_rows * prev_dim * w_arr.shape[1]
        prev_dim = w_arr.shape[1]
    bytes_accessed = 4 * (x2d.size + sum(a.size for a in flat_params)
                          + n_rows * head_w)

    kernel = _make_mlp_kernel(n_hidden)

    out = pl.pallas_call(
        kernel,
        out_shape=jax.ShapeDtypeStruct((n_rows, head_w), jnp.float32),
        grid=(grid_m,),
        in_specs=in_specs,
        out_specs=out_spec,
        compiler_params=pltpu.CompilerParams(
            dimension_semantics=("parallel",),
        ),
        cost_estimate=pl.CostEstimate(
            flops=int(flops), transcendentals=0,
            bytes_accessed=int(bytes_accessed)),
    )(x2d, *flat_params)

    head = out[:, 0]  # (n_rows,) -- no padded rows/lanes to strip

    if is_regression:
        # torch: x.view(num_batch, d_out).view(-1) -> requires num_class == d_out
        assert num_class == d_out, "regression reshape assumes num_class == d_out"
        return head.reshape(num_batch, d_out).reshape(-1)
    return head.reshape(num_batch, num_class)


def _init_linear(key, d_in, d_out):
    """Deterministic PyTorch-style (kaiming-uniform-ish) init."""
    kw, kb = jax.random.split(key)
    bound = 1.0 / jnp.sqrt(jnp.float32(d_in))
    w = jax.random.uniform(kw, (d_in, d_out), jnp.float32, -bound, bound)
    b = jax.random.uniform(kb, (1, d_out), jnp.float32, -bound, bound)
    return w, b


def _reference_forward(x, params, *, is_regression, d_out):
    num_batch, num_class = x.shape[:2]
    h = x.reshape(num_batch * num_class, -1).astype(jnp.float32)
    for w, b in params[:-1]:
        h = jnp.maximum(h @ w + b, 0.0)
    wh, bh = params[-1]
    h = h @ wh + bh
    if is_regression:
        return h.reshape(num_batch, d_out).reshape(-1)
    return h.reshape(num_batch, num_class)


if __name__ == "__main__":
    # Module hyper-params (small, consistent with TabPTM):
    distance = "eucman"              # 2 distance metrics of 3 chars each
    n_dist = len([distance[i:i + 3] for i in range(0, len(distance), 3)])
    d_in_repeat = n_dist * 2         # = 4
    d_in = 8                         # numK
    d_layers = [32, 32]
    num_batch, num_class = 2, 3

    first_in = d_in * d_in_repeat    # 32 (flattened distance_num * numK)

    # Deterministic parameter init.
    key = jax.random.PRNGKey(0)
    keys = jax.random.split(key, len(d_layers) + 2)
    params = []
    prev = first_in
    for i, d in enumerate(d_layers):
        params.append(_init_linear(keys[i], prev, d))
        prev = d
    params.append(_init_linear(keys[len(d_layers)], prev, 1))  # head

    # --- classification branch: batch x num_class x distance_num x numK ---
    x = jax.random.normal(
        keys[-1], (num_batch, num_class, n_dist, first_in // n_dist), jnp.float32
    )
    out = jax.block_until_ready(
        tabptm_forward(x, params, is_regression=False, d_out=num_class))
    ref = _reference_forward(x, params, is_regression=False, d_out=num_class)
    assert out.shape == (num_batch, num_class)
    assert jnp.allclose(out, ref, atol=1e-5, rtol=1e-5)

    # --- multi-tile ragged grid (21 rows, tile_m_max=8 -> 3 tiles, last ragged)
    nb2, nc2 = 7, 3
    x2 = jax.random.normal(
        jax.random.PRNGKey(1), (nb2, nc2, n_dist, first_in // n_dist), jnp.float32
    )
    out2 = jax.block_until_ready(
        tabptm_forward(x2, params, is_regression=False, d_out=nc2, tile_m_max=8))
    ref2 = _reference_forward(x2, params, is_regression=False, d_out=nc2)
    assert out2.shape == (nb2, nc2)
    assert jnp.allclose(out2, ref2, atol=1e-5, rtol=1e-5)

    # --- regression branch: batch x 1 x distance_num x (numK*2) ---
    nb3 = 5
    x3 = jax.random.normal(
        jax.random.PRNGKey(2), (nb3, 1, n_dist, 2 * d_in), jnp.float32
    )
    out3 = jax.block_until_ready(
        tabptm_forward(x3, params, is_regression=True, d_out=1))
    ref3 = _reference_forward(x3, params, is_regression=True, d_out=1)
    assert out3.shape == (nb3,)
    assert jnp.allclose(out3, ref3, atol=1e-5, rtol=1e-5)

    print("KERNEL_OK")
</pallas_src>

<mosaic_0001>
module attributes {stable_mosaic.version = 11 : i64} {
  func.func @kernel(%arg0: i32, %arg1: memref<8x32xf32, #tpu.memory_space<vmem>>, %arg2: memref<32x128xf32, #tpu.memory_space<vmem>>, %arg3: memref<1x128xf32, #tpu.memory_space<vmem>>, %arg4: memref<128x128xf32, #tpu.memory_space<vmem>>, %arg5: memref<1x128xf32, #tpu.memory_space<vmem>>, %arg6: memref<128x1xf32, #tpu.memory_space<vmem>>, %arg7: memref<1x1xf32, #tpu.memory_space<vmem>>, %arg8: memref<8x1xf32, #tpu.memory_space<vmem>>) attributes {dimension_semantics = [#tpu.dimension_semantics<parallel>], iteration_bounds = array<i64: 1>, scalar_prefetch = 0 : i64, scratch_operands = 0 : i64, tpu.core_type = #tpu.core_type<tc>, window_params = [{transform_indices = @transform_0, window_bounds = array<i64: 8, 32>}, {pipeline_mode = #tpu.pipeline_mode<synchronous>, transform_indices = @transform_1, window_bounds = array<i64: 32, 128>}, {pipeline_mode = #tpu.pipeline_mode<synchronous>, transform_indices = @transform_2, window_bounds = array<i64: 1, 128>}, {pipeline_mode = #tpu.pipeline_mode<synchronous>, transform_indices = @transform_3, window_bounds = array<i64: 128, 128>}, {pipeline_mode = #tpu.pipeline_mode<synchronous>, transform_indices = @transform_4, window_bounds = array<i64: 1, 128>}, {pipeline_mode = #tpu.pipeline_mode<synchronous>, transform_indices = @transform_5, window_bounds = array<i64: 128, 1>}, {pipeline_mode = #tpu.pipeline_mode<synchronous>, transform_indices = @transform_6, window_bounds = array<i64: 1, 1>}, {transform_indices = @transform_7, window_bounds = array<i64: 8, 1>}]} {
    %c0 = arith.constant 0 : index
    %c0_0 = arith.constant 0 : index
    %0 = vector.load %arg1[%c0, %c0_0] : memref<8x32xf32, #tpu.memory_space<vmem>>, vector<8x32xf32>
    %c0_1 = arith.constant 0 : index
    %c0_2 = arith.constant 0 : index
    %1 = vector.load %arg2[%c0_1, %c0_2] : memref<32x128xf32, #tpu.memory_space<vmem>>, vector<32x128xf32>
    %c0_3 = arith.constant 0 : index
    %c0_4 = arith.constant 0 : index
    %2 = vector.load %arg3[%c0_3, %c0_4] : memref<1x128xf32, #tpu.memory_space<vmem>>, vector<1x128xf32>
    %cst = arith.constant dense<0.000000e+00> : vector<8x128xf32>
    %3 = tpu.matmul %0, %1, %cst {dimension_numbers = #tpu.dot_dimension_numbers<[1], [0], [0], [1], [0, 0, 1, 1], [], []>} : vector<8x32xf32>, vector<32x128xf32>, vector<8x128xf32> -> vector<8x128xf32>
    %4 = vector.broadcast %2 : vector<1x128xf32> to vector<8x128xf32>
    %5 = arith.addf %3, %4 : vector<8x128xf32>
    %cst_5 = arith.constant 0.000000e+00 : f32
    %6 = vector.broadcast %cst_5 : f32 to vector<8x128xf32>
    %7 = arith.maximumf %5, %6 : vector<8x128xf32>
    %c0_6 = arith.constant 0 : index
    %c0_7 = arith.constant 0 : index
    %8 = vector.load %arg4[%c0_6, %c0_7] : memref<128x128xf32, #tpu.memory_space<vmem>>, vector<128x128xf32>
    %c0_8 = arith.constant 0 : index
    %c0_9 = arith.constant 0 : index
    %9 = vector.load %arg5[%c0_8, %c0_9] : memref<1x128xf32, #tpu.memory_space<vmem>>, vector<1x128xf32>
    %cst_10 = arith.constant dense<0.000000e+00> : vector<8x128xf32>
    %10 = tpu.matmul %7, %8, %cst_10 {dimension_numbers = #tpu.dot_dimension_numbers<[1], [0], [0], [1], [0, 0, 1, 1], [], []>} : vector<8x128xf32>, vector<128x128xf32>, vector<8x128xf32> -> vector<8x128xf32>
    %11 = vector.broadcast %9 : vector<1x128xf32> to vector<8x128xf32>
    %12 = arith.addf %10, %11 : vector<8x128xf32>
    %cst_11 = arith.constant 0.000000e+00 : f32
    %13 = vector.broadcast %cst_11 : f32 to vector<8x128xf32>
    %14 = arith.maximumf %12, %13 : vector<8x128xf32>
    %c0_12 = arith.constant 0 : index
    %c0_13 = arith.constant 0 : index
    %15 = vector.load %arg6[%c0_12, %c0_13] : memref<128x1xf32, #tpu.memory_space<vmem>>, vector<128x1xf32>
    %c0_14 = arith.constant 0 : index
    %c0_15 = arith.constant 0 : index
    %16 = vector.load %arg7[%c0_14, %c0_15] : memref<1x1xf32, #tpu.memory_space<vmem>>, vector<1x1xf32>
    %cst_16 = arith.constant dense<0.000000e+00> : vector<8x1xf32>
    %17 = tpu.matmul %14, %15, %cst_16 {dimension_numbers = #tpu.dot_dimension_numbers<[1], [0], [0], [1], [0, 0, 1, 1], [], []>} : vector<8x128xf32>, vector<128x1xf32>, vector<8x1xf32> -> vector<8x1xf32>
    %18 = vector.broadcast %16 : vector<1x1xf32> to vector<8x1xf32>
    %19 = arith.addf %17, %18 : vector<8x1xf32>
    %c0_17 = arith.constant 0 : index
    %c0_18 = arith.constant 0 : index
    %20 = vector.load %arg8[%c0_17, %c0_18] : memref<8x1xf32, #tpu.memory_space<vmem>>, vector<8x1xf32>
    tpu.vector_store %arg8[%c0_17, %c0_18], %19 {strides = array<i32>} : memref<8x1xf32, #tpu.memory_space<vmem>>, vector<8x1xf32>,
    return
  }
  func.func @transform_0(%arg0: i32) -> (i32, i32) {
    %c0_i32 = arith.constant 0 : i32
    %c0_i32_0 = arith.constant 0 : i32
    return %arg0, %c0_i32 : i32, i32
  }
  func.func @transform_1(%arg0: i32) -> (i32, i32) {
    %c0_i32 = arith.constant 0 : i32
    %c0_i32_0 = arith.constant 0 : i32
    %c0_i32_1 = arith.constant 0 : i32
    return %c0_i32, %c0_i32_0 : i32, i32
  }
  func.func @transform_2(%arg0: i32) -> (i32, i32) {
    %c0_i32 = arith.constant 0 : i32
    %c0_i32_0 = arith.constant 0 : i32
    %c0_i32_1 = arith.constant 0 : i32
    return %c0_i32, %c0_i32_0 : i32, i32
  }
  func.func @transform_3(%arg0: i32) -> (i32, i32) {
    %c0_i32 = arith.constant 0 : i32
    %c0_i32_0 = arith.constant 0 : i32
    %c0_i32_1 = arith.constant 0 : i32
    return %c0_i32, %c0_i32_0 : i32, i32
  }
  func.func @transform_4(%arg0: i32) -> (i32, i32) {
    %c0_i32 = arith.constant 0 : i32
    %c0_i32_0 = arith.constant 0 : i32
    %c0_i32_1 = arith.constant 0 : i32
    return %c0_i32, %c0_i32_0 : i32, i32
  }
  func.func @transform_5(%arg0: i32) -> (i32, i32) {
    %c0_i32 = arith.constant 0 : i32
    %c0_i32_0 = arith.constant 0 : i32
    %c0_i32_1 = arith.constant 0 : i32
    return %c0_i32, %c0_i32_0 : i32, i32
  }
  func.func @transform_6(%arg0: i32) -> (i32, i32) {
    %c0_i32 = arith.constant 0 : i32
    %c0_i32_0 = arith.constant 0 : i32
    %c0_i32_1 = arith.constant 0 : i32
    return %c0_i32, %c0_i32_0 : i32, i32
  }
  func.func @transform_7(%arg0: i32) -> (i32, i32) {
    %c0_i32 = arith.constant 0 : i32
    %c0_i32_0 = arith.constant 0 : i32
    return %arg0, %c0_i32 : i32, i32
  }
}

</mosaic_0001>

<llo_original>
// kernel: tpu_custom_call.1
$region0: #{tpu_custom_call.1}
  #allocation0 [shape = 'u32[]', space=smem, size = 0x4, offset = 0x4, fixed_abs, tag = 'smem constant byte address 0x4 - core index']
  #allocation1 [shape = 'u32[144,128]{1,0:T(1,128)}', space=vmem, size = 0x12000, scoped, tag = 'internal scratch']
  #allocation2 [shape = 'f32[1,1]{1,0:T(1,128)S(1)}', space=vmem, size = 0x200, scoped, tag = 'scoped memory for tpu_custom_call.1']
  %s0 = inlined_call_operand.vmem [shape: f32[6,32], index: 0, kind: input, shape index: {}]
  %s1 = inlined_call_operand.hbm [shape: f32[32,128], index: 1, kind: input, shape index: {}]
  %s2 = inlined_call_operand.hbm [shape: f32[1,128], index: 2, kind: input, shape index: {}]
  %s3 = inlined_call_operand.vmem [shape: f32[128,128], index: 3, kind: input, shape index: {}]
  %s4 = inlined_call_operand.vmem [shape: f32[1,128], index: 4, kind: input, shape index: {}]
  %s5 = inlined_call_operand.vmem [shape: f32[128,1], index: 5, kind: input, shape index: {}]
  %s6 = inlined_call_operand.<no memory space> [shape: f32[1,1], index: 6, kind: input, shape index: {}]
  %s7 = inlined_call_operand.vmem [shape: f32[6,1], index: 7, kind: output, shape index: {}]
  %s8 = sld [smem:[#allocation0]]
  $region46: #{tpu_custom_call.1} parent=0
    _
  %s10 = ssub.s32 1, %s8
  %s11 = scalar_select 0, %s10, %s8
  %v12 = vstv %s6
  %13 = vst [vmem:[#allocation2] sm:$0x1] %v12
  $region1: #{tpu_custom_call.1} parent=0
    #allocation3 [shape = 'u8[16384]{0}', space=vmem, size = 0x4000, scoped, tag = 'input window, operand 1, single buffered']
    #allocation4 [shape = 's32[1]{0}', space=sflag, size = 0x4, scoped, tag = 'scoped memory for tpu_custom_call.1']
    #allocation5 [shape = 'u8[512]{0}', space=vmem, size = 0x400, scoped, tag = 'input window, operand 2, single buffered']
    #allocation6 [shape = 's32[1]{0}', space=sflag, size = 0x4, scoped, tag = 'scoped memory for tpu_custom_call.1']
    %14 = vsyncpa [#allocation4], 0
    %15 = vsyncpa [#allocation6], 0
    // Predicated region
    $region2: #{tpu_custom_call.1} parent=1 // pred_check
      _
    $region3: #{tpu_custom_call.1} parent=1 // pred_check_branch
      %17 = sbr.rel (0) target = $region5
    $region4: #{tpu_custom_call.1} parent=1 // pred_region
      _
    $region5: #{tpu_custom_call.1} parent=1 // pred_fallthru
      _
    // Predicated region
    $region6: #{tpu_custom_call.1} parent=1 // pred_check
      _
    $region7: #{tpu_custom_call.1} parent=1 // pred_check_branch
      %19 = sbr.rel (0) target = $region9
    $region8: #{tpu_custom_call.1} parent=1 // pred_region
      %s21 = ssub.s32 512, 512
      %22 = vsyncadd [#allocation4], %s21
      %s23 = sshll.u32 [#allocation3], 4
      %s24 = int_to_ptr.vmem [resolvable:$true] %s23
      %29 = dma.hbm_to_vmem [thread:$0]  %s1, 512, %s24, [#allocation4], 128, 128, 8
    $region9: #{tpu_custom_call.1} parent=1 // pred_fallthru
      _
    // Predicated region
    $region10: #{tpu_custom_call.1} parent=1 // pred_check
      _
    $region11: #{tpu_custom_call.1} parent=1 // pred_check_branch
      %31 = sbr.rel (0) target = $region13
    $region12: #{tpu_custom_call.1} parent=1 // pred_region
      %s33 = ssub.s32 16, 16
      %34 = vsyncadd [#allocation6], %s33
      %s36 = sshll.u32 [#allocation5], 4
      %s37 = int_to_ptr.vmem [resolvable:$true] %s36
      %39 = dma.hbm_to_vmem [thread:$0]  %s2, 16, %s37, [#allocation6]
    $region13: #{tpu_custom_call.1} parent=1 // pred_fallthru
      _
    // Predicated region
    $region14: #{tpu_custom_call.1} parent=1 // pred_check
      _
    $region15: #{tpu_custom_call.1} parent=1 // pred_check_branch
      %41 = sbr.rel (0) target = $region17
    $region16: #{tpu_custom_call.1} parent=1 // pred_region
      _
    $region17: #{tpu_custom_call.1} parent=1 // pred_fallthru
      _
    // Predicated region
    $region18: #{tpu_custom_call.1} parent=1 // pred_check
      _
    $region19: #{tpu_custom_call.1} parent=1 // pred_check_branch
      %43 = sbr.rel (0) target = $region21
    $region20: #{tpu_custom_call.1} parent=1 // pred_region
      _
    $region21: #{tpu_custom_call.1} parent=1 // pred_fallthru
      _
    // Predicated region
    $region22: #{tpu_custom_call.1} parent=1 // pred_check
      _
    $region23: #{tpu_custom_call.1} parent=1 // pred_check_branch
      %45 = sbr.rel (0) target = $region25
    $region24: #{tpu_custom_call.1} parent=1 // pred_region
      _
    $region25: #{tpu_custom_call.1} parent=1 // pred_fallthru
      _
    // Predicated region
    $region26: #{tpu_custom_call.1} parent=1 // pred_check
      _
    $region27: #{tpu_custom_call.1} parent=1 // pred_check_branch
      %47 = sbr.rel (0) target = $region29
    $region28: #{tpu_custom_call.1} parent=1 // pred_region
      _
    $region29: #{tpu_custom_call.1} parent=1 // pred_fallthru
      _
    // Predicated region
    $region30: #{tpu_custom_call.1} parent=1 // pred_check
      _
    $region31: #{tpu_custom_call.1} parent=1 // pred_check_branch
      %49 = sbr.rel (0) target = $region33
    $region32: #{tpu_custom_call.1} parent=1 // pred_region
      %50 = dma.done [#allocation4], 512
    $region33: #{tpu_custom_call.1} parent=1 // pred_fallthru
      _
    // Predicated region
    $region34: #{tpu_custom_call.1} parent=1 // pred_check
      _
    $region35: #{tpu_custom_call.1} parent=1 // pred_check_branch
      %52 = sbr.rel (0) target = $region37
    $region36: #{tpu_custom_call.1} parent=1 // pred_region
      %53 = dma.done [#allocation6], 16
    $region37: #{tpu_custom_call.1} parent=1 // pred_fallthru
      _
    %v54 = vld [vmem:[%s0] sm:$0xff]
    %v55 = vld [vmem:[#allocation3] sm:$0xff]
    %v56 = vld [vmem:[#allocation3 + $0x8] sm:$0xff]
    %v57 = vld [vmem:[#allocation3 + $0x10] sm:$0xff]
    %v58 = vld [vmem:[#allocation3 + $0x18] sm:$0xff]
    %v59 = vld [vmem:[#allocation5] sm:$0x1]
    %v61 = vlaneseq
    %v62 = vshrl.u32 %v61, 7
    %v63 = vsub.s32 0, %v62
    %v64 = vrot.slane %v59, %v63
    %vm66 = vcmask 261120
    %v68 = vsel %vm66, %v54, 0
    %70 = vmatprep.subr.mxu0 0.0
    %71 = vmatpush1.msra.mxu0 0.0
    %72 = vmatprep.subr.mxu0 0.0
    %73 = vmatpush1.msra.mxu0 0.0
    %74 = vmatprep.subr.mxu0 0.0
    %75 = vmatpush1.msra.mxu0 0.0
    %76 = vmatprep.subr.mxu0 0.0
    %77 = vmatpush1.msra.mxu0 0.0
    %78 = vmatprep.subr.mxu0 0.0
    %79 = vmatpush1.msra.mxu0 0.0
    %80 = vmatprep.subr.mxu0 0.0
    %81 = vmatpush1.msra.mxu0 0.0
    %82 = vmatprep.subr.mxu0 0.0
    %83 = vmatpush1.msra.mxu0 0.0
    %84 = vmatprep.subr.mxu0 0.0
    %85 = vmatpush1.msra.mxu0 0.0
    %86 = vmatprep.subr.mxu0 0.0
    %87 = vmatpush1.msra.mxu0 0.0
    %88 = vmatprep.subr.mxu0 0.0
    %89 = vmatpush1.msra.mxu0 0.0
    %90 = vmatprep.subr.mxu0 0.0
    %91 = vmatpush1.msra.mxu0 0.0
    %92 = vmatprep.subr.mxu0 0.0
    %93 = vmatpush1.msra.mxu0 0.0
    %94 = vmatprep.subr.mxu0 0.0
    %95 = vmatpush1.msra.mxu0 %v58
    %96 = vmatprep.subr.mxu0 0.0
    %97 = vmatpush1.msra.mxu0 %v57
    %98 = vmatprep.subr.mxu0 0.0
    %99 = vmatpush1.msra.mxu0 %v56
    %100 = vmatprep.subr.mxu0 0.0
    %101 = vmatpush1.msra.mxu0 %v55
    %102 = vmatprep.subr.mxu0 0.0
    %103 = vmatpush2.msra.mxu0 0.0
    %104 = vmatprep.subr.mxu0 0.0
    %105 = vmatpush2.msra.mxu0 0.0
    %106 = vmatprep.subr.mxu0 0.0
    %107 = vmatpush2.msra.mxu0 0.0
    %108 = vmatprep.subr.mxu0 0.0
    %109 = vmatpush2.msra.mxu0 0.0
    %110 = vmatprep.subr.mxu0 0.0
    %111 = vmatpush2.msra.mxu0 0.0
    %112 = vmatprep.subr.mxu0 0.0
    %113 = vmatpush2.msra.mxu0 0.0
    %114 = vmatprep.subr.mxu0 0.0
    %115 = vmatpush2.msra.mxu0 0.0
    %116 = vmatprep.subr.mxu0 0.0
    %117 = vmatpush2.msra.mxu0 0.0
    %118 = vmatprep.subr.mxu0 0.0
    %119 = vmatpush2.msra.mxu0 0.0
    %120 = vmatprep.subr.mxu0 0.0
    %121 = vmatpush2.msra.mxu0 0.0
    %122 = vmatprep.subr.mxu0 0.0
    %123 = vmatpush2.msra.mxu0 0.0
    %124 = vmatprep.subr.mxu0 0.0
    %125 = vmatpush2.msra.mxu0 0.0
    %126 = vmatprep.subr.mxu0 0.0
    %127 = vmatpush2.msra.mxu0 0.0
    %128 = vmatprep.subr.mxu0 0.0
    %129 = vmatpush2.msra.mxu0 0.0
    %130 = vmatprep.subr.mxu0 0.0
    %131 = vmatpush2.msra.mxu0 0.0
    %132 = vmatprep.subr.mxu0 0.0
    %133 = vmatpush2.msra.mxu0 0.0
    %134 = vmatprep.mubr.f32.mxu0 0.0
    %135 = vmatmul.mubr.f32.gmra.mxu0 %v68
    %v136 = vpop.f32.mrf.mxu0
    %v137 = vadd.f32 %v64, %v136
    %v138 = vpop.f32.mrf.mxu0
    %139 = vdwg.mxu0
    %v140 = vmax.f32 %v137, 0.0
    %v141 = vld [vmem:[%s3] sm:$0xff]
    %v142 = vld [vmem:[%s3 + $0x8] sm:$0xff]
    %v143 = vld [vmem:[%s3 + $0x10] sm:$0xff]
    %v144 = vld [vmem:[%s3 + $0x18] sm:$0xff]
    %v145 = vld [vmem:[%s3 + $0x20] sm:$0xff]
    %v146 = vld [vmem:[%s3 + $0x28] sm:$0xff]
    %v147 = vld [vmem:[%s3 + $0x30] sm:$0xff]
    %v148 = vld [vmem:[%s3 + $0x38] sm:$0xff]
    %v149 = vld [vmem:[%s3 + $0x40] sm:$0xff]
    %v150 = vld [vmem:[%s3 + $0x48] sm:$0xff]
    %v151 = vld [vmem:[%s3 + $0x50] sm:$0xff]
    %v152 = vld [vmem:[%s3 + $0x58] sm:$0xff]
    %v153 = vld [vmem:[%s3 + $0x60] sm:$0xff]
    %v154 = vld [vmem:[%s3 + $0x68] sm:$0xff]
    %v155 = vld [vmem:[%s3 + $0x70] sm:$0xff]
    %v156 = vld [vmem:[%s3 + $0x78] sm:$0xff]
    %v157 = vld [vmem:[%s4] sm:$0x1]
    %v159 = vlaneseq
    %v160 = vshrl.u32 %v159, 7
    %v161 = vsub.s32 0, %v160
    %v162 = vrot.slane %v157, %v161
    %164 = vmatprep.subr.mxu0 0.0
    %165 = vmatpush1.msra.mxu0 %v156
    %166 = vmatprep.subr.mxu0 0.0
    %167 = vmatpush1.msra.mxu0 %v155
    %168 = vmatprep.subr.mxu0 0.0
    %169 = vmatpush1.msra.mxu0 %v154
    %170 = vmatprep.subr.mxu0 0.0
    %171 = vmatpush1.msra.mxu0 %v153
    %172 = vmatprep.subr.mxu0 0.0
    %173 = vmatpush1.msra.mxu0 %v152
    %174 = vmatprep.subr.mxu0 0.0
    %175 = vmatpush1.msra.mxu0 %v151
    %176 = vmatprep.subr.mxu0 0.0
    %177 = vmatpush1.msra.mxu0 %v150
    %178 = vmatprep.subr.mxu0 0.0
    %179 = vmatpush1.msra.mxu0 %v149
    %180 = vmatprep.subr.mxu0 0.0
    %181 = vmatpush1.msra.mxu0 %v148
    %182 = vmatprep.subr.mxu0 0.0
    %183 = vmatpush1.msra.mxu0 %v147
    %184 = vmatprep.subr.mxu0 0.0
    %185 = vmatpush1.msra.mxu0 %v146
    %186 = vmatprep.subr.mxu0 0.0
    %187 = vmatpush1.msra.mxu0 %v145
    %188 = vmatprep.subr.mxu0 0.0
    %189 = vmatpush1.msra.mxu0 %v144
    %190 = vmatprep.subr.mxu0 0.0
    %191 = vmatpush1.msra.mxu0 %v143
    %192 = vmatprep.subr.mxu0 0.0
    %193 = vmatpush1.msra.mxu0 %v142
    %194 = vmatprep.subr.mxu0 0.0
    %195 = vmatpush1.msra.mxu0 %v141
    %196 = vmatprep.subr.mxu0 0.0
    %197 = vmatpush2.msra.mxu0 0.0
    %198 = vmatprep.subr.mxu0 0.0
    %199 = vmatpush2.msra.mxu0 0.0
    %200 = vmatprep.subr.mxu0 0.0
    %201 = vmatpush2.msra.mxu0 0.0
    %202 = vmatprep.subr.mxu0 0.0
    %203 = vmatpush2.msra.mxu0 0.0
    %204 = vmatprep.subr.mxu0 0.0
    %205 = vmatpush2.msra.mxu0 0.0
    %206 = vmatprep.subr.mxu0 0.0
    %207 = vmatpush2.msra.mxu0 0.0
    %208 = vmatprep.subr.mxu0 0.0
    %209 = vmatpush2.msra.mxu0 0.0
    %210 = vmatprep.subr.mxu0 0.0
    %211 = vmatpush2.msra.mxu0 0.0
    %212 = vmatprep.subr.mxu0 0.0
    %213 = vmatpush2.msra.mxu0 0.0
    %214 = vmatprep.subr.mxu0 0.0
    %215 = vmatpush2.msra.mxu0 0.0
    %216 = vmatprep.subr.mxu0 0.0
    %217 = vmatpush2.msra.mxu0 0.0
    %218 = vmatprep.subr.mxu0 0.0
    %219 = vmatpush2.msra.mxu0 0.0
    %220 = vmatprep.subr.mxu0 0.0
    %221 = vmatpush2.msra.mxu0 0.0
    %222 = vmatprep.subr.mxu0 0.0
    %223 = vmatpush2.msra.mxu0 0.0
    %224 = vmatprep.subr.mxu0 0.0
    %225 = vmatpush2.msra.mxu0 0.0
    %226 = vmatprep.subr.mxu0 0.0
    %227 = vmatpush2.msra.mxu0 0.0
    %228 = vmatprep.mubr.f32.mxu0 0.0
    %229 = vmatmul.mubr.f32.gmra.mxu0 %v140
    %v230 = vpop.f32.mrf.mxu0
    %v231 = vadd.f32 %v162, %v230
    %v232 = vpop.f32.mrf.mxu0
    %233 = vdwg.mxu0
    %v234 = vmax.f32 %v231, 0.0
    %v235 = vld [vmem:[%s5] sm:$0xff]
    %v236 = vld [vmem:[%s5 + $0x8] sm:$0xff]
    %v237 = vld [vmem:[%s5 + $0x10] sm:$0xff]
    %v238 = vld [vmem:[%s5 + $0x18] sm:$0xff]
    %v239 = vld [vmem:[%s5 + $0x20] sm:$0xff]
    %v240 = vld [vmem:[%s5 + $0x28] sm:$0xff]
    %v241 = vld [vmem:[%s5 + $0x30] sm:$0xff]
    %v242 = vld [vmem:[%s5 + $0x38] sm:$0xff]
    %v243 = vld [vmem:[%s5 + $0x40] sm:$0xff]
    %v244 = vld [vmem:[%s5 + $0x48] sm:$0xff]
    %v245 = vld [vmem:[%s5 + $0x50] sm:$0xff]
    %v246 = vld [vmem:[%s5 + $0x58] sm:$0xff]
    %v247 = vld [vmem:[%s5 + $0x60] sm:$0xff]
    %v248 = vld [vmem:[%s5 + $0x68] sm:$0xff]
    %v249 = vld [vmem:[%s5 + $0x70] sm:$0xff]
    %v250 = vld [vmem:[%s5 + $0x78] sm:$0xff]
    %v251 = vld [vmem:[#allocation2] sm:$0x1]
    %v253 = vlaneseq
    %v254 = vshrl.u32 %v253, 7
    %v255 = vsub.s32 0, %v254
    %v256 = vrot.slane %v251, %v255
    %258 = vmatprep.subr.mxu0 0.0
    %259 = vmatpush1.msra.mxu0 %v250
    %260 = vmatprep.subr.mxu0 0.0
    %261 = vmatpush1.msra.mxu0 %v249
    %262 = vmatprep.subr.mxu0 0.0
    %263 = vmatpush1.msra.mxu0 %v248
    %264 = vmatprep.subr.mxu0 0.0
    %265 = vmatpush1.msra.mxu0 %v247
    %266 = vmatprep.subr.mxu0 0.0
    %267 = vmatpush1.msra.mxu0 %v246
    %268 = vmatprep.subr.mxu0 0.0
    %269 = vmatpush1.msra.mxu0 %v245
    %270 = vmatprep.subr.mxu0 0.0
    %271 = vmatpush1.msra.mxu0 %v244
    %272 = vmatprep.subr.mxu0 0.0
    %273 = vmatpush1.msra.mxu0 %v243
    %274 = vmatprep.subr.mxu0 0.0
    %275 = vmatpush1.msra.mxu0 %v242
    %276 = vmatprep.subr.mxu0 0.0
    %277 = vmatpush1.msra.mxu0 %v241
    %278 = vmatprep.subr.mxu0 0.0
    %279 = vmatpush1.msra.mxu0 %v240
    %280 = vmatprep.subr.mxu0 0.0
    %281 = vmatpush1.msra.mxu0 %v239
    %282 = vmatprep.subr.mxu0 0.0
    %283 = vmatpush1.msra.mxu0 %v238
    %284 = vmatprep.subr.mxu0 0.0
    %285 = vmatpush1.msra.mxu0 %v237
    %286 = vmatprep.subr.mxu0 0.0
    %287 = vmatpush1.msra.mxu0 %v236
    %288 = vmatprep.subr.mxu0 0.0
    %289 = vmatpush1.msra.mxu0 %v235
    %290 = vmatprep.subr.mxu0 0.0
    %291 = vmatpush2.msra.mxu0 0.0
    %292 = vmatprep.subr.mxu0 0.0
    %293 = vmatpush2.msra.mxu0 0.0
    %294 = vmatprep.subr.mxu0 0.0
    %295 = vmatpush2.msra.mxu0 0.0
    %296 = vmatprep.subr.mxu0 0.0
    %297 = vmatpush2.msra.mxu0 0.0
    %298 = vmatprep.subr.mxu0 0.0
    %299 = vmatpush2.msra.mxu0 0.0
    %300 = vmatprep.subr.mxu0 0.0
    %301 = vmatpush2.msra.mxu0 0.0
    %302 = vmatprep.subr.mxu0 0.0
    %303 = vmatpush2.msra.mxu0 0.0
    %304 = vmatprep.subr.mxu0 0.0
    %305 = vmatpush2.msra.mxu0 0.0
    %306 = vmatprep.subr.mxu0 0.0
    %307 = vmatpush2.msra.mxu0 0.0
    %308 = vmatprep.subr.mxu0 0.0
    %309 = vmatpush2.msra.mxu0 0.0
    %310 = vmatprep.subr.mxu0 0.0
    %311 = vmatpush2.msra.mxu0 0.0
    %312 = vmatprep.subr.mxu0 0.0
    %313 = vmatpush2.msra.mxu0 0.0
    %314 = vmatprep.subr.mxu0 0.0
    %315 = vmatpush2.msra.mxu0 0.0
    %316 = vmatprep.subr.mxu0 0.0
    %317 = vmatpush2.msra.mxu0 0.0
    %318 = vmatprep.subr.mxu0 0.0
    %319 = vmatpush2.msra.mxu0 0.0
    %320 = vmatprep.subr.mxu0 0.0
    %321 = vmatpush2.msra.mxu0 0.0
    %322 = vmatprep.mubr.f32.mxu0 0.0
    %323 = vmatmul.mubr.f32.gmra.mxu0 %v234
    %v324 = vpop.f32.mrf.mxu0
    %v325 = vadd.f32 %v256, %v324
    %v326 = vpop.f32.mrf.mxu0
    %327 = vdwg.mxu0
    %vm328 = vcmask 7168
    %329 = vst.msk [vmem:[%s7] sm:$0xff] %vm328, %v325
    // Predicated region
    $region38: #{tpu_custom_call.1} parent=1 // pred_check
      _
    $region39: #{tpu_custom_call.1} parent=1 // pred_check_branch
      %331 = sbr.rel (0) target = $region41
    $region40: #{tpu_custom_call.1} parent=1 // pred_region
      _
    $region41: #{tpu_custom_call.1} parent=1 // pred_fallthru
      _
    // Predicated region
    $region42: #{tpu_custom_call.1} parent=1 // pred_check
      _
    $region43: #{tpu_custom_call.1} parent=1 // pred_check_branch
      %333 = sbr.rel (0) target = $region45
    $region44: #{tpu_custom_call.1} parent=1 // pred_region
      _
    $region45: #{tpu_custom_call.1} parent=1 // pred_fallthru
      _
    %334 = vsyncpa [#allocation4], 1
    %335 = vsyncpa [#allocation6], 1

</llo_original>
